<compile_context>
chip_gen: v7x
topology: tpu7x:2x2x1
jax: 0.10.0
libtpu: 0.0.40
codegen_flags: <defaults>
</compile_context>

<pallas_src>
import functools

import jax
import jax.numpy as jnp
from jax.experimental import pallas as pl
from jax.experimental.pallas import tpu as pltpu


_F32_TEMP_BYTES = 12          # conservative per-element f32 temporaries in-kernel
_TARGET_BLOCK_BYTES = 8 << 20  # ~8 MiB native-dtype x block per grid step


# ------------------------------------------------------------------ kernels --

def _col_sums(x_native, xf, use_mxu):
    """Per-channel sum / sum-of-squares over the batch (row) axis.

    For bf16 inputs the plain sum goes to the MXU (ones-vector matmul with f32
    accumulation) so it costs zero VALU ops; sum-of-squares stays on the VALU
    in f32 for precision."""
    if use_mxu:
        ones = jnp.ones((1, x_native.shape[0]), x_native.dtype)
        s = jnp.dot(ones, x_native, preferred_element_type=jnp.float32)
    else:
        s = jnp.sum(xf, axis=0, keepdims=True)
    sq = jnp.sum(xf * xf, axis=0, keepdims=True)
    return s, sq


def _sbn_train_kernel(x_ref, rm_ref, rv_ref, y_ref, nm_ref, nv_ref,
                      *, momentum, eps, b_total, use_mxu):
    """Single-pass training kernel: full batch resident, tiled over channels."""
    x = x_ref[...]                                # (B, td) native dtype
    xf = x.astype(jnp.float32)

    s, sq = _col_sums(x, xf, use_mxu)
    batch_mean = s * (1.0 / b_total)
    var = (sq - s * batch_mean) * (1.0 / (b_total - 1))   # unbiased (PyTorch)
    var = jnp.maximum(var, 0.0)                   # guard one-sweep cancellation

    new_mean = (1.0 - momentum) * rm_ref[...] + momentum * batch_mean
    new_var = (1.0 - momentum) * rv_ref[...] + momentum * var
    nm_ref[...] = new_mean
    nv_ref[...] = new_var

    scale = jax.lax.rsqrt(new_var + eps)
    shift = -new_mean * scale
    y_ref[...] = (xf * scale + shift).astype(y_ref.dtype)


def _sbn_stats_kernel(x_ref, sum_ref, sq_ref, *, b_total, tile_b, ragged,
                      use_mxu):
    """Fallback pass 1: accumulate per-channel sum / sumsq over batch tiles."""
    i = pl.program_id(1)                          # batch ("arbitrary") axis

    @pl.when(i == 0)
    def _():
        sum_ref[...] = jnp.zeros_like(sum_ref)
        sq_ref[...] = jnp.zeros_like(sq_ref)

    x = x_ref[...]

    def accumulate(xn):
        s, sq = _col_sums(xn, xn.astype(jnp.float32), use_mxu)
        sum_ref[...] += s
        sq_ref[...] += sq

    if ragged:
        last = pl.num_programs(1) - 1

        @pl.when(i == last)                       # mask only the ragged tile
        def _():
            row = jax.lax.broadcasted_iota(jnp.int32, x.shape, 0) + i * tile_b
            accumulate(jnp.where(row < b_total, x, jnp.zeros_like(x)))

        @pl.when(i != last)
        def _():
            accumulate(x)
    else:
        accumulate(x)


def _sbn_finalize_kernel(x_ref, sum_ref, sq_ref, rm_ref, rv_ref,
                         y_ref, nm_ref, nv_ref, scale_ref, shift_ref,
                         *, momentum, eps, b_total):
    """Fallback pass 2: fused EMA update + normalization (y = x*scale+shift)."""
    i = pl.program_id(1)                          # batch ("arbitrary") axis

    @pl.when(i == 0)
    def _():
        s = sum_ref[...]
        batch_mean = s * (1.0 / b_total)
        var = (sq_ref[...] - s * batch_mean) * (1.0 / (b_total - 1))
        var = jnp.maximum(var, 0.0)
        nm = (1.0 - momentum) * rm_ref[...] + momentum * batch_mean
        nv = (1.0 - momentum) * rv_ref[...] + momentum * var
        nm_ref[...] = nm
        nv_ref[...] = nv
        inv = jax.lax.rsqrt(nv + eps)
        scale_ref[...] = inv
        shift_ref[...] = -nm * inv

    xf = x_ref[...].astype(jnp.float32)
    y_ref[...] = (xf * scale_ref[...] + shift_ref[...]).astype(y_ref.dtype)


def _sbn_scale_shift_kernel(x_ref, scale_ref, shift_ref, y_ref):
    """Eval-mode normalization with precomputed scale/shift."""
    xf = x_ref[...].astype(jnp.float32)
    y_ref[...] = (xf * scale_ref[...] + shift_ref[...]).astype(y_ref.dtype)


# -------------------------------------------------------------- tiling utils --

def _vmem_capacity_bytes():
    """Per-TensorCore VMEM capacity; robust to per-chip reporting on v7x."""
    cap = 64 << 20
    try:
        cap = int(pltpu.get_tpu_info().vmem_capacity_bytes)
    except Exception:
        pass
    try:
        kind = jax.devices()[0].device_kind.lower()
    except Exception:
        kind = ""
    if "v7" in kind or "7x" in kind:
        cap = min(cap, 64 << 20)      # 64 MiB per TC even if query is per-chip
    return cap


def _pick_tile_d(b, d, itemsize, budget, hard_cap):
    """Channel tile for the single-pass path (full batch resident in VMEM)."""
    if d <= 128:
        return d
    per_elem = 4 * itemsize + _F32_TEMP_BYTES     # pipelined bufs + f32 temps
    max_td = max(128, budget // (per_elem * b))
    if hard_cap is not None:
        max_td = min(max_td, max(128, hard_cap // (b * itemsize)))
    target_td = max(128, _TARGET_BLOCK_BYTES // (b * itemsize))
    td = min(max_td, target_td, d)
    td = max(128, (td // 128) * 128)
    # Keep >=4 channel tiles when D allows so the "parallel" axis can split
    # across v7x's two TensorCores and the pipeline has enough steps.
    if d >= 4 * 128 and pl.cdiv(d, td) < 4:
        quarter = (((d + 3) // 4 + 127) // 128) * 128
        td = max(128, min(td, quarter))
    return td


def _pick_tiles_2d(b, d, itemsize, budget, hard_cap):
    """(tile_b, tile_d) for the 2D-tiled normalization / stats kernels."""
    per_elem = 4 * itemsize + 8
    # Lane-dense (wide) channel tiles are the biggest single DMA lever.
    td = d if d <= 128 else max(128, min(1024, (d // 128) * 128))
    row_granule = 16 if itemsize < 4 else 8
    max_tb = budget // (per_elem * td)
    if hard_cap is not None:
        max_tb = min(max_tb, hard_cap // (td * itemsize))
    target_tb = _TARGET_BLOCK_BYTES // (td * itemsize)
    tb = min(b, max_tb, target_tb)
    tb = max(tb, 8)
    if tb >= b:
        tb = b
    elif tb >= row_granule:
        tb = (tb // row_granule) * row_granule
    else:
        tb = (tb // 8) * 8
    return tb, td


# ------------------------------------------------------------------ wrapper --

def smoothed_batch_norm(x, running_mean, running_var, *, momentum=0.1,
                        eps=1e-5, training=True, max_x_block_bytes=None):
    """x: [B, D] float (f32/bf16); running stats: [D].

    Returns (y [B, D] in x.dtype, new_running_mean f32[D], new_running_var
    f32[D]).  `max_x_block_bytes` optionally caps the per-step x block (testing
    hook for the large-B two-pass fallback)."""
    B, D = x.shape
    x_dtype = x.dtype
    itemsize = jnp.dtype(x_dtype).itemsize
    momentum = float(momentum)
    eps = float(eps)

    rm = running_mean.reshape(1, D).astype(jnp.float32)
    rv = running_var.reshape(1, D).astype(jnp.float32)

    cap = _vmem_capacity_bytes()
    vmem_limit = int(cap * 0.85)       # headroom for Mosaic internal scratch
    budget = int(cap * 0.65)           # planned footprint incl. f32 temporaries
    hard_cap = None if max_x_block_bytes is None else int(max_x_block_bytes)

    def _scale_shift_call(scale, shift):
        tb, td = _pick_tiles_2d(B, D, itemsize, budget, hard_cap)
        nd, nb = pl.cdiv(D, td), pl.cdiv(B, tb)
        return pl.pallas_call(
            _sbn_scale_shift_kernel,
            out_shape=jax.ShapeDtypeStruct((B, D), x_dtype),
            grid_spec=pltpu.PrefetchScalarGridSpec(
                num_scalar_prefetch=0, grid=(nd, nb),
                in_specs=[pl.BlockSpec((tb, td), lambda j, i: (i, j)),
                          pl.BlockSpec((1, td), lambda j, i: (0, j)),
                          pl.BlockSpec((1, td), lambda j, i: (0, j))],
                out_specs=pl.BlockSpec((tb, td), lambda j, i: (i, j)),
            ),
            compiler_params=pltpu.CompilerParams(
                dimension_semantics=("parallel", "parallel"),
                vmem_limit_bytes=vmem_limit),
            cost_estimate=pl.CostEstimate(
                flops=int(2 * B * D), transcendentals=0,
                bytes_accessed=int(2 * B * D * itemsize + 2 * D * 4)),
        )(x, scale, shift)

    if not training:
        scale = jax.lax.rsqrt(rv + eps)          # O(D) XLA preamble
        shift = -rm * scale
        return _scale_shift_call(scale, shift), running_mean, running_var

    if B < 2:
        raise ValueError("SmoothedBatchNorm training forward needs batch >= 2 "
                         "(unbiased variance divides by B-1), matching PyTorch.")

    per_elem_train = 4 * itemsize + _F32_TEMP_BYTES
    min_td = 128 if D >= 128 else D
    min_block = B * min_td
    single_pass_ok = (min_block * per_elem_train) <= budget
    if hard_cap is not None:
        single_pass_ok = single_pass_ok and (min_block * itemsize <= hard_cap)

    if single_pass_ok:
        td = _pick_tile_d(B, D, itemsize, budget, hard_cap)
        use_mxu = (x_dtype == jnp.bfloat16) and B >= 64
        x_spec = pl.BlockSpec((B, td), lambda j: (0, j))
        row_spec = pl.BlockSpec((1, td), lambda j: (0, j))
        y, nm, nv = pl.pallas_call(
            functools.partial(_sbn_train_kernel, momentum=momentum, eps=eps,
                              b_total=B, use_mxu=use_mxu),
            out_shape=(jax.ShapeDtypeStruct((B, D), x_dtype),
                       jax.ShapeDtypeStruct((1, D), jnp.float32),
                       jax.ShapeDtypeStruct((1, D), jnp.float32)),
            grid_spec=pltpu.PrefetchScalarGridSpec(
                num_scalar_prefetch=0, grid=(pl.cdiv(D, td),),
                in_specs=[x_spec, row_spec, row_spec],
                out_specs=[x_spec, row_spec, row_spec],
            ),
            compiler_params=pltpu.CompilerParams(
                dimension_semantics=("parallel",),
                vmem_limit_bytes=vmem_limit),
            cost_estimate=pl.CostEstimate(
                flops=int(8 * B * D), transcendentals=int(D),
                bytes_accessed=int(2 * B * D * itemsize + 6 * D * 4)),
        )(x, rm, rv)
        return y, nm.reshape(D), nv.reshape(D)

    # ---- large-B fallback: pass 1 (stats) + pass 2 (fused EMA + normalize) --
    tb, td = _pick_tiles_2d(B, D, itemsize, budget, hard_cap)
    nd, nb = pl.cdiv(D, td), pl.cdiv(B, tb)
    ragged = (B % tb) != 0
    use_mxu = (x_dtype == jnp.bfloat16) and tb >= 64

    ssum, ssq = pl.pallas_call(
        functools.partial(_sbn_stats_kernel, b_total=B, tile_b=tb,
                          ragged=ragged, use_mxu=use_mxu),
        out_shape=(jax.ShapeDtypeStruct((1, D), jnp.float32),
                   jax.ShapeDtypeStruct((1, D), jnp.float32)),
        grid_spec=pltpu.PrefetchScalarGridSpec(
            num_scalar_prefetch=0, grid=(nd, nb),
            in_specs=[pl.BlockSpec((tb, td), lambda j, i: (i, j))],
            out_specs=[pl.BlockSpec((1, td), lambda j, i: (0, j)),
                       pl.BlockSpec((1, td), lambda j, i: (0, j))],
        ),
        compiler_params=pltpu.CompilerParams(
            dimension_semantics=("parallel", "arbitrary"),
            vmem_limit_bytes=vmem_limit),
        cost_estimate=pl.CostEstimate(
            flops=int(4 * B * D), transcendentals=0,
            bytes_accessed=int(B * D * itemsize + 2 * D * 4)),
    )(x)

    y, nm, nv = pl.pallas_call(
        functools.partial(_sbn_finalize_kernel, momentum=momentum, eps=eps,
                          b_total=B),
        out_shape=(jax.ShapeDtypeStruct((B, D), x_dtype),
                   jax.ShapeDtypeStruct((1, D), jnp.float32),
                   jax.ShapeDtypeStruct((1, D), jnp.float32)),
        grid_spec=pltpu.PrefetchScalarGridSpec(
            num_scalar_prefetch=0, grid=(nd, nb),
            in_specs=[pl.BlockSpec((tb, td), lambda j, i: (i, j)),
                      pl.BlockSpec((1, td), lambda j, i: (0, j)),
                      pl.BlockSpec((1, td), lambda j, i: (0, j)),
                      pl.BlockSpec((1, td), lambda j, i: (0, j)),
                      pl.BlockSpec((1, td), lambda j, i: (0, j))],
            out_specs=[pl.BlockSpec((tb, td), lambda j, i: (i, j)),
                       pl.BlockSpec((1, td), lambda j, i: (0, j)),
                       pl.BlockSpec((1, td), lambda j, i: (0, j))],
            scratch_shapes=[pltpu.VMEM((1, td), jnp.float32),
                            pltpu.VMEM((1, td), jnp.float32)],
        ),
        compiler_params=pltpu.CompilerParams(
            dimension_semantics=("parallel", "arbitrary"),
            vmem_limit_bytes=vmem_limit),
        cost_estimate=pl.CostEstimate(
            flops=int(2 * B * D + 10 * D), transcendentals=int(D),
            bytes_accessed=int(2 * B * D * itemsize + 6 * D * 4)),
    )(x, ssum, ssq, rm, rv)
    return y, nm.reshape(D), nv.reshape(D)


# ---------------------------------------------------------------- reference --

def _reference(x, rm, rv, momentum=0.1, eps=1e-5, training=True):
    x = x.astype(jnp.float32)
    if training:
        b = x.shape[0]
        bm = jnp.mean(x, axis=0)
        bv = jnp.sum((x - bm) ** 2, axis=0) / (b - 1)
        nm = (1 - momentum) * rm + momentum * bm
        nv = (1 - momentum) * rv + momentum * bv
        y = (x - nm) / jnp.sqrt(nv + eps)
        return y, nm, nv
    y = (x - rm) / jnp.sqrt(rv + eps)
    return y, rm, rv


if __name__ == "__main__":
    key = jax.random.PRNGKey(0)
    B, D = 8, 32                                    # FloatTensor[B, D]
    x = jax.random.normal(key, (B, D), jnp.float32) * 2.0 + 0.5
    rm0 = jnp.zeros((D,), jnp.float32)              # BatchNorm1d buffer init
    rv0 = jnp.ones((D,), jnp.float32)

    # 1) training-mode forward (f32, single-pass path).
    y, nm, nv = smoothed_batch_norm(x, rm0, rv0, momentum=0.1, eps=1e-5,
                                    training=True)
    jax.block_until_ready((y, nm, nv))
    y_ref, nm_ref, nv_ref = _reference(x, rm0, rv0)
    assert jnp.allclose(y, y_ref, atol=1e-5, rtol=1e-5)
    assert jnp.allclose(nm, nm_ref, atol=1e-5, rtol=1e-5)
    assert jnp.allclose(nv, nv_ref, atol=1e-5, rtol=1e-5)

    # 2) eval-mode forward with the updated running stats.
    y_eval, _, _ = smoothed_batch_norm(x, nm, nv, training=False)
    jax.block_until_ready(y_eval)
    y_eval_ref, _, _ = _reference(x, nm, nv, training=False)
    assert jnp.allclose(y_eval, y_eval_ref, atol=1e-5, rtol=1e-5)

    # 3) bf16 single-pass (MXU batch-sum path); x stays bf16 end-to-end.
    B3, D3 = 128, 256
    x3 = jax.random.normal(jax.random.PRNGKey(2), (B3, D3), jnp.float32) * 1.5 + 0.25
    x3b = x3.astype(jnp.bfloat16)
    rm3 = jnp.zeros((D3,), jnp.float32)
    rv3 = jnp.ones((D3,), jnp.float32)
    y3, nm3, nv3 = smoothed_batch_norm(x3b, rm3, rv3, training=True)
    jax.block_until_ready((y3, nm3, nv3))
    assert y3.dtype == jnp.bfloat16
    y3_ref, nm3_ref, nv3_ref = _reference(x3b.astype(jnp.float32), rm3, rv3)
    assert jnp.allclose(y3.astype(jnp.float32), y3_ref, atol=5e-2, rtol=5e-2)
    assert jnp.allclose(nm3, nm3_ref, atol=5e-3, rtol=5e-2)
    assert jnp.allclose(nv3, nv3_ref, atol=5e-3, rtol=5e-2)

    # 4) large-B fallback (two-pass, fused EMA in pass 2), forced at small
    #    shapes via the block-size hook; B % tile_b == 0 (unmasked stats).
    B4, D4 = 24, 160
    x4 = jax.random.normal(jax.random.PRNGKey(1), (B4, D4), jnp.float32)
    rm4 = jnp.zeros((D4,), jnp.float32)
    rv4 = jnp.ones((D4,), jnp.float32)
    y4, nm4, nv4 = smoothed_batch_norm(x4, rm4, rv4, training=True,
                                       max_x_block_bytes=4096)
    jax.block_until_ready((y4, nm4, nv4))
    y4_ref, nm4_ref, nv4_ref = _reference(x4, rm4, rv4)
    assert jnp.allclose(y4, y4_ref, atol=1e-5, rtol=1e-5)
    assert jnp.allclose(nm4, nm4_ref, atol=1e-5, rtol=1e-5)
    assert jnp.allclose(nv4, nv4_ref, atol=1e-5, rtol=1e-5)

    # 5) fallback with a ragged last batch tile (masked only on the last tile).
    B5, D5 = 20, 200
    x5 = jax.random.normal(jax.random.PRNGKey(3), (B5, D5), jnp.float32)
    rm5 = jnp.zeros((D5,), jnp.float32)
    rv5 = jnp.ones((D5,), jnp.float32)
    y5, nm5, nv5 = smoothed_batch_norm(x5, rm5, rv5, training=True,
                                       max_x_block_bytes=4096)
    jax.block_until_ready((y5, nm5, nv5))
    y5_ref, nm5_ref, nv5_ref = _reference(x5, rm5, rv5)
    assert jnp.allclose(y5, y5_ref, atol=1e-5, rtol=1e-5)
    assert jnp.allclose(nm5, nm5_ref, atol=1e-5, rtol=1e-5)
    assert jnp.allclose(nv5, nv5_ref, atol=1e-5, rtol=1e-5)

    print("KERNEL_OK")
</pallas_src>

<mosaic_0001>
module attributes {stable_mosaic.version = 11 : i64} {
  func.func @_sbn_train_kernel(%arg0: i32, %arg1: memref<8x32xf32, #tpu.memory_space<vmem>>, %arg2: memref<1x32xf32, #tpu.memory_space<vmem>>, %arg3: memref<1x32xf32, #tpu.memory_space<vmem>>, %arg4: memref<8x32xf32, #tpu.memory_space<vmem>>, %arg5: memref<1x32xf32, #tpu.memory_space<vmem>>, %arg6: memref<1x32xf32, #tpu.memory_space<vmem>>) attributes {dimension_semantics = [#tpu.dimension_semantics<parallel>], iteration_bounds = array<i64: 1>, scalar_prefetch = 0 : i64, scratch_operands = 0 : i64, tpu.core_type = #tpu.core_type<tc>, window_params = [{transform_indices = @transform_0, window_bounds = array<i64: 8, 32>}, {transform_indices = @transform_1, window_bounds = array<i64: 1, 32>}, {transform_indices = @transform_2, window_bounds = array<i64: 1, 32>}, {transform_indices = @transform_3, window_bounds = array<i64: 8, 32>}, {transform_indices = @transform_4, window_bounds = array<i64: 1, 32>}, {transform_indices = @transform_5, window_bounds = array<i64: 1, 32>}]} {
    %c0 = arith.constant 0 : index
    %c0_0 = arith.constant 0 : index
    %0 = vector.load %arg1[%c0, %c0_0] : memref<8x32xf32, #tpu.memory_space<vmem>>, vector<8x32xf32>
    %cst = arith.constant dense<0.000000e+00> : vector<32xf32>
    %1 = vector.multi_reduction <add>, %0, %cst [0] : vector<8x32xf32> to vector<32xf32>
    %2 = vector.shape_cast %1 : vector<32xf32> to vector<1x32xf32>
    %3 = arith.mulf %0, %0 : vector<8x32xf32>
    %cst_1 = arith.constant dense<0.000000e+00> : vector<32xf32>
    %4 = vector.multi_reduction <add>, %3, %cst_1 [0] : vector<8x32xf32> to vector<32xf32>
    %5 = vector.shape_cast %4 : vector<32xf32> to vector<1x32xf32>
    %cst_2 = arith.constant 1.250000e-01 : f32
    %6 = vector.broadcast %cst_2 : f32 to vector<1x32xf32>
    %7 = arith.mulf %2, %6 : vector<1x32xf32>
    %8 = arith.mulf %2, %7 : vector<1x32xf32>
    %9 = arith.subf %5, %8 : vector<1x32xf32>
    %cst_3 = arith.constant 0.142857149 : f32
    %10 = vector.broadcast %cst_3 : f32 to vector<1x32xf32>
    %11 = arith.mulf %9, %10 : vector<1x32xf32>
    %cst_4 = arith.constant 0.000000e+00 : f32
    %12 = vector.broadcast %cst_4 : f32 to vector<1x32xf32>
    %13 = arith.maximumf %11, %12 : vector<1x32xf32>
    %c0_5 = arith.constant 0 : index
    %c0_6 = arith.constant 0 : index
    %14 = vector.load %arg2[%c0_5, %c0_6] : memref<1x32xf32, #tpu.memory_space<vmem>>, vector<1x32xf32>
    %cst_7 = arith.constant 0.899999976 : f32
    %15 = vector.broadcast %cst_7 : f32 to vector<1x32xf32>
    %16 = arith.mulf %15, %14 : vector<1x32xf32>
    %cst_8 = arith.constant 1.000000e-01 : f32
    %17 = vector.broadcast %cst_8 : f32 to vector<1x32xf32>
    %18 = arith.mulf %17, %7 : vector<1x32xf32>
    %19 = arith.addf %16, %18 : vector<1x32xf32>
    %c0_9 = arith.constant 0 : index
    %c0_10 = arith.constant 0 : index
    %20 = vector.load %arg3[%c0_9, %c0_10] : memref<1x32xf32, #tpu.memory_space<vmem>>, vector<1x32xf32>
    %cst_11 = arith.constant 0.899999976 : f32
    %21 = vector.broadcast %cst_11 : f32 to vector<1x32xf32>
    %22 = arith.mulf %21, %20 : vector<1x32xf32>
    %cst_12 = arith.constant 1.000000e-01 : f32
    %23 = vector.broadcast %cst_12 : f32 to vector<1x32xf32>
    %24 = arith.mulf %23, %13 : vector<1x32xf32>
    %25 = arith.addf %22, %24 : vector<1x32xf32>
    %c0_13 = arith.constant 0 : index
    %c0_14 = arith.constant 0 : index
    %26 = vector.load %arg5[%c0_13, %c0_14] : memref<1x32xf32, #tpu.memory_space<vmem>>, vector<1x32xf32>
    tpu.vector_store %arg5[%c0_13, %c0_14], %19 {strides = array<i32>} : memref<1x32xf32, #tpu.memory_space<vmem>>, vector<1x32xf32>,
    %c0_15 = arith.constant 0 : index
    %c0_16 = arith.constant 0 : index
    %27 = vector.load %arg6[%c0_15, %c0_16] : memref<1x32xf32, #tpu.memory_space<vmem>>, vector<1x32xf32>
    tpu.vector_store %arg6[%c0_15, %c0_16], %25 {strides = array<i32>} : memref<1x32xf32, #tpu.memory_space<vmem>>, vector<1x32xf32>,
    %cst_17 = arith.constant 9.99999974E-6 : f32
    %28 = vector.broadcast %cst_17 : f32 to vector<1x32xf32>
    %29 = arith.addf %25, %28 : vector<1x32xf32>
    %30 = math.rsqrt %29 : vector<1x32xf32>
    %cst_18 = arith.constant 0.000000e+00 : f32
    %31 = vector.broadcast %cst_18 : f32 to vector<1x32xf32>
    %32 = arith.subf %31, %19 : vector<1x32xf32>
    %33 = arith.mulf %32, %30 : vector<1x32xf32>
    %34 = vector.broadcast %30 : vector<1x32xf32> to vector<8x32xf32>
    %35 = arith.mulf %0, %34 : vector<8x32xf32>
    %36 = vector.broadcast %33 : vector<1x32xf32> to vector<8x32xf32>
    %37 = arith.addf %35, %36 : vector<8x32xf32>
    %c0_19 = arith.constant 0 : index
    %c0_20 = arith.constant 0 : index
    %38 = vector.load %arg4[%c0_19, %c0_20] : memref<8x32xf32, #tpu.memory_space<vmem>>, vector<8x32xf32>
    tpu.vector_store %arg4[%c0_19, %c0_20], %37 {strides = array<i32>} : memref<8x32xf32, #tpu.memory_space<vmem>>, vector<8x32xf32>,
    return
  }
  func.func @transform_0(%arg0: i32) -> (i32, i32) {
    %c0_i32 = arith.constant 0 : i32
    %c0_i32_0 = arith.constant 0 : i32
    return %c0_i32, %arg0 : i32, i32
  }
  func.func @transform_1(%arg0: i32) -> (i32, i32) {
    %c0_i32 = arith.constant 0 : i32
    %c0_i32_0 = arith.constant 0 : i32
    return %c0_i32, %arg0 : i32, i32
  }
  func.func @transform_2(%arg0: i32) -> (i32, i32) {
    %c0_i32 = arith.constant 0 : i32
    %c0_i32_0 = arith.constant 0 : i32
    return %c0_i32, %arg0 : i32, i32
  }
  func.func @transform_3(%arg0: i32) -> (i32, i32) {
    %c0_i32 = arith.constant 0 : i32
    %c0_i32_0 = arith.constant 0 : i32
    return %c0_i32, %arg0 : i32, i32
  }
  func.func @transform_4(%arg0: i32) -> (i32, i32) {
    %c0_i32 = arith.constant 0 : i32
    %c0_i32_0 = arith.constant 0 : i32
    return %c0_i32, %arg0 : i32, i32
  }
  func.func @transform_5(%arg0: i32) -> (i32, i32) {
    %c0_i32 = arith.constant 0 : i32
    %c0_i32_0 = arith.constant 0 : i32
    return %c0_i32, %arg0 : i32, i32
  }
}

</mosaic_0001>

<llo_original>
// kernel: tpu_custom_call.1
$region0: #{tpu_custom_call.1}
  #allocation0 [shape = 'u32[]', space=smem, size = 0x4, offset = 0x4, fixed_abs, tag = 'smem constant byte address 0x4 - core index']
  #allocation1 [shape = 'u32[144,128]{1,0:T(1,128)}', space=vmem, size = 0x12000, scoped, tag = 'internal scratch']
  %s0 = inlined_call_operand.hbm [shape: f32[8,32], index: 0, kind: input, shape index: {}]
  %s1 = inlined_call_operand.vmem [shape: f32[1,32], index: 1, kind: input, shape index: {}]
  %s2 = inlined_call_operand.vmem [shape: f32[1,32], index: 2, kind: input, shape index: {}]
  %s3 = inlined_call_operand.hbm [shape: f32[8,32], index: 3, kind: output, shape index: {0}]
  %s4 = inlined_call_operand.hbm [shape: f32[1,32], index: 4, kind: output, shape index: {1}]
  %s5 = inlined_call_operand.hbm [shape: f32[1,32], index: 5, kind: output, shape index: {2}]
  %6 = xla_tuple %s3, %s4, %s5
  %s7 = sld [smem:[#allocation0]]
  $region42: #{tpu_custom_call.1} parent=0
    _
  %s9 = ssub.s32 1, %s7
  %s10 = scalar_select 0, %s9, %s7
  $region1: #{tpu_custom_call.1} parent=0
    #allocation2 [shape = 'u8[4096]{0}', space=vmem, size = 0x1000, scoped, tag = 'input window, operand 0, single buffered']
    #allocation3 [shape = 's32[1]{0}', space=sflag, size = 0x4, scoped, tag = 'scoped memory for tpu_custom_call.1']
    #allocation4 [shape = 's32[1]{0}', space=sflag, size = 0x4, scoped, tag = 'scoped memory for tpu_custom_call.1']
    #allocation5 [shape = 'u8[4096]{0}', space=vmem, size = 0x1000, scoped, tag = 'output window, operand 0, single buffered']
    #allocation6 [shape = 'u8[512]{0}', space=vmem, size = 0x400, scoped, tag = 'output window, operand 1, single buffered']
    #allocation7 [shape = 's32[1]{0}', space=sflag, size = 0x4, scoped, tag = 'scoped memory for tpu_custom_call.1']
    #allocation8 [shape = 'u8[512]{0}', space=vmem, size = 0x400, scoped, tag = 'output window, operand 2, single buffered']
    %11 = vsyncpa [#allocation3], 0
    %12 = vsyncpa [#allocation4], 0
    %13 = vsyncpa [#allocation7], 0
    // Predicated region
    $region2: #{tpu_custom_call.1} parent=1 // pred_check
      _
    $region3: #{tpu_custom_call.1} parent=1 // pred_check_branch
      %15 = sbr.rel (0) target = $region5
    $region4: #{tpu_custom_call.1} parent=1 // pred_region
      %s17 = ssub.s32 128, 128
      %18 = vsyncadd [#allocation3], %s17
      %s20 = sshll.u32 [#allocation2], 4
      %s21 = int_to_ptr.vmem [resolvable:$true] %s20
      %23 = dma.hbm_to_vmem [thread:$0]  %s0, 128, %s21, [#allocation3]
    $region5: #{tpu_custom_call.1} parent=1 // pred_fallthru
      _
    // Predicated region
    $region6: #{tpu_custom_call.1} parent=1 // pred_check
      _
    $region7: #{tpu_custom_call.1} parent=1 // pred_check_branch
      %25 = sbr.rel (0) target = $region9
    $region8: #{tpu_custom_call.1} parent=1 // pred_region
      _
    $region9: #{tpu_custom_call.1} parent=1 // pred_fallthru
      _
    // Predicated region
    $region10: #{tpu_custom_call.1} parent=1 // pred_check
      _
    $region11: #{tpu_custom_call.1} parent=1 // pred_check_branch
      %27 = sbr.rel (0) target = $region13
    $region12: #{tpu_custom_call.1} parent=1 // pred_region
      _
    $region13: #{tpu_custom_call.1} parent=1 // pred_fallthru
      _
    // Predicated region
    $region14: #{tpu_custom_call.1} parent=1 // pred_check
      _
    $region15: #{tpu_custom_call.1} parent=1 // pred_check_branch
      %29 = sbr.rel (0) target = $region17
    $region16: #{tpu_custom_call.1} parent=1 // pred_region
      %30 = dma.done [#allocation3], 128
    $region17: #{tpu_custom_call.1} parent=1 // pred_fallthru
      _
    %v31 = vld [vmem:[#allocation2] sm:$0xff]
    %vm32 = vcmask 261120
    %v33 = vsel %vm32, %v31, 0.0
    %v34 = vrot.slane %v33, 4
    %v35 = vadd.f32 %v33, %v34
    %v36 = vrot.slane %v35, 2
    %v37 = vadd.f32 %v35, %v36
    %v38 = vrot.slane %v37, 1
    %v39 = vadd.f32 %v37, %v38
    %v40 = vmul.f32 %v31, %v31
    %v41 = vsel %vm32, %v40, 0.0
    %v42 = vrot.slane %v41, 4
    %v43 = vadd.f32 %v41, %v42
    %v44 = vrot.slane %v43, 2
    %v45 = vadd.f32 %v43, %v44
    %v46 = vrot.slane %v45, 1
    %v47 = vadd.f32 %v45, %v46
    %v48 = vmul.f32 %v39, 0.125
    %v49 = vmul.f32 %v39, %v48
    %v50 = vsub.f32 %v47, %v49
    %v51 = vmul.f32 %v50, 0.14285715
    %v52 = vmax.f32 %v51, 0.0
    %v53 = vld [vmem:[%s1] sm:$0x1]
    %v54 = vmul.f32 %v53, 0.9
    %v55 = vmul.f32 %v48, 0.1
    %v56 = vadd.f32 %v54, %v55
    %v57 = vld [vmem:[%s2] sm:$0x1]
    %v58 = vmul.f32 %v57, 0.9
    %v59 = vmul.f32 %v52, 0.1
    %v60 = vadd.f32 %v58, %v59
    %vm61 = vcmask 253952
    %62 = vst.msk [vmem:[#allocation6] sm:$0x1] %vm61, %v56
    %63 = vst.msk [vmem:[#allocation8] sm:$0x1] %vm61, %v60
    %v64 = vadd.f32 %v60, 1e-05
    %v65 = vrsqrt.pop %v64
    %v66 = vsub.f32 0.0, %v56
    %v67 = vmul.f32 %v66, %v65
    %v69 = vlaneseq
    %v70 = vshrl.u32 %v69, 7
    %v71 = vsub.s32 0, %v70
    %v72 = vrot.slane %v65, %v71
    %v74 = vmul.f32 %v31, %v72
    %v76 = vlaneseq
    %v77 = vshrl.u32 %v76, 7
    %v78 = vsub.s32 0, %v77
    %v79 = vrot.slane %v67, %v78
    %v81 = vadd.f32 %v74, %v79
    %82 = vst.msk [vmem:[#allocation5] sm:$0xff] %vm32, %v81
    // Predicated region
    $region18: #{tpu_custom_call.1} parent=1 // pred_check
      _
    $region19: #{tpu_custom_call.1} parent=1 // pred_check_branch
      %84 = sbr.rel (0) target = $region21
    $region20: #{tpu_custom_call.1} parent=1 // pred_region
      %s86 = ssub.s32 128, 128
      %87 = vsyncadd [#allocation4], %s86
      %s89 = sshll.u32 [#allocation5], 4
      %s90 = int_to_ptr.vmem [resolvable:$true] %s89
      %92 = dma.vmem_to_hbm [thread:$0]  %s90, 128, %s3, [#allocation4]
    $region21: #{tpu_custom_call.1} parent=1 // pred_fallthru
      _
    // Predicated region
    $region22: #{tpu_custom_call.1} parent=1 // pred_check
      _
    $region23: #{tpu_custom_call.1} parent=1 // pred_check_branch
      %94 = sbr.rel (0) target = $region25
    $region24: #{tpu_custom_call.1} parent=1 // pred_region
      %s96 = ssub.s32 16, 16
      %97 = vsyncadd [#allocation7], %s96
      %s99 = sshll.u32 [#allocation6], 4
      %s100 = int_to_ptr.vmem [resolvable:$true] %s99
      %102 = dma.vmem_to_hbm [thread:$0]  %s100, 16, %s4, [#allocation7]
    $region25: #{tpu_custom_call.1} parent=1 // pred_fallthru
      _
    // Predicated region
    $region26: #{tpu_custom_call.1} parent=1 // pred_check
      _
    $region27: #{tpu_custom_call.1} parent=1 // pred_check_branch
      %104 = sbr.rel (0) target = $region29
    $region28: #{tpu_custom_call.1} parent=1 // pred_region
      %s106 = ssub.s32 16, 16
      %107 = vsyncadd [#allocation7], %s106
      %s109 = sshll.u32 [#allocation8], 4
      %s110 = int_to_ptr.vmem [resolvable:$true] %s109
      %112 = dma.vmem_to_hbm [thread:$0]  %s110, 16, %s5, [#allocation7]
    $region29: #{tpu_custom_call.1} parent=1 // pred_fallthru
      _
    // Predicated region
    $region30: #{tpu_custom_call.1} parent=1 // pred_check
      _
    $region31: #{tpu_custom_call.1} parent=1 // pred_check_branch
      %114 = sbr.rel (0) target = $region33
    $region32: #{tpu_custom_call.1} parent=1 // pred_region
      %115 = dma.done [#allocation4], 128
    $region33: #{tpu_custom_call.1} parent=1 // pred_fallthru
      _
    // Predicated region
    $region34: #{tpu_custom_call.1} parent=1 // pred_check
      _
    $region35: #{tpu_custom_call.1} parent=1 // pred_check_branch
      %117 = sbr.rel (0) target = $region37
    $region36: #{tpu_custom_call.1} parent=1 // pred_region
      %118 = dma.done [#allocation7], 16
    $region37: #{tpu_custom_call.1} parent=1 // pred_fallthru
      _
    // Predicated region
    $region38: #{tpu_custom_call.1} parent=1 // pred_check
      _
    $region39: #{tpu_custom_call.1} parent=1 // pred_check_branch
      %120 = sbr.rel (0) target = $region41
    $region40: #{tpu_custom_call.1} parent=1 // pred_region
      %121 = dma.done [#allocation7], 16
    $region41: #{tpu_custom_call.1} parent=1 // pred_fallthru
      _
    %122 = vsyncpa [#allocation3], 1
    %123 = vsyncpa [#allocation4], 1
    %124 = vsyncpa [#allocation7], 1

</llo_original>
